<compile_context>
chip_gen: v6e
topology: v6e:2x2x1
jax: 0.10.0
libtpu: 0.0.40
codegen_flags: <defaults>
</compile_context>

<pallas_src>
import functools
import math

import jax
import jax.numpy as jnp
from jax.experimental import pallas as pl
from jax.experimental.pallas import tpu as pltpu


# ----------------------------------------------------------------------------- helpers

def _round_up(x, m):
    return -(-x // m) * m


def _vmem_capacity_bytes():
    """Physical VMEM per TensorCore (v5e/v6e: 128 MiB, v7x: 64 MiB)."""
    try:
        return int(pltpu.get_tpu_info().vmem_capacity_bytes)
    except Exception:
        return 64 * 1024 * 1024   # conservative fallback (v7x-sized)


def _vmem_bytes(tm, dim, th, itemsize):
    """Honest per-step VMEM footprint estimate."""
    # double-buffered tiles: x, fused-w13, w2, out
    dbuf = 2 * (tm * dim + dim * 2 * th + th * dim + tm * dim) * itemsize
    acc = tm * dim * 4                                   # f32 accumulator scratch
    inter = tm * 2 * th * 4 + tm * th * 4 + tm * th * itemsize  # h13, g (f32), g cast
    return dbuf + acc + inter


# ----------------------------------------------------------------------------- kernel

def _ffn_kernel(x_ref, w13_ref, w2_ref, o_ref, acc_ref, *, th):
    """One (M-tile, hidden-tile) step of the SwiGLU FFN."""
    h = pl.program_id(1)

    @pl.when(h == 0)
    def _():
        acc_ref[...] = jnp.zeros_like(acc_ref)

    x = x_ref[...]                                                       # (tm, dim)
    # Fused gate+up projection: cols [0:th] = W1^T tile, [th:2*th] = W3^T tile.
    h13 = jnp.dot(x, w13_ref[...], preferred_element_type=jnp.float32)   # (tm, 2*th)
    h1 = h13[:, :th]
    h3 = h13[:, th:]
    g = (h1 * jax.nn.sigmoid(h1)) * h3                                   # silu(h1)*h3, f32

    acc_ref[...] += jnp.dot(g.astype(w2_ref.dtype), w2_ref[...],
                            preferred_element_type=jnp.float32)          # (tm, dim)

    @pl.when(h == pl.num_programs(1) - 1)
    def _():
        o_ref[...] = acc_ref[...].astype(o_ref.dtype)


# ------------------------------------------------------------------- weight preparation

def fuse_ffn_weights(w1, w3, w2, th=None):
    """Pre-fuse / block the FFN weights ONCE (hoisted out of the forward hot path).

    Args (PyTorch nn.Linear (out, in) convention):
      w1, w3: (hidden, dim);  w2: (dim, hidden)
    Returns:
      w13: (n_h, dim, 2*th)   block h = [W1^T tile h | W3^T tile h]  (contiguous DMA)
      w2b: (n_h, th, dim)
      th:  hidden tile used
    `hidden` is zero-padded up to a multiple of th; padded units contribute 0.
    """
    hidden, dim = w1.shape
    assert w3.shape == (hidden, dim) and w2.shape == (dim, hidden)

    itemsize = jnp.dtype(w1.dtype).itemsize
    if th is None:
        budget = max(_vmem_capacity_bytes() - 16 * 1024 * 1024, 24 * 1024 * 1024)
        th = min(512, _round_up(hidden, 128))
        while th > 128 and _vmem_bytes(128, dim, th, itemsize) > budget:
            th //= 2
    assert th % 128 == 0, "hidden tile must be lane-aligned (multiple of 128)"

    hidden_pad = _round_up(hidden, th)
    n_h = hidden_pad // th
    pad = hidden_pad - hidden

    w1_t = w1.T                       # (dim, hidden)
    w3_t = w3.T
    w2_t = w2.T                       # (hidden, dim)
    if pad:
        w1_t = jnp.pad(w1_t, ((0, 0), (0, pad)))
        w3_t = jnp.pad(w3_t, ((0, 0), (0, pad)))
        w2_t = jnp.pad(w2_t, ((0, pad), (0, 0)))

    w13 = jnp.concatenate(
        [w1_t.reshape(dim, n_h, th), w3_t.reshape(dim, n_h, th)], axis=2)   # (dim, n_h, 2*th)
    w13 = jnp.transpose(w13, (1, 0, 2))                                     # (n_h, dim, 2*th)
    w2b = w2_t.reshape(n_h, th, dim)                                        # (n_h, th, dim)
    return jnp.asarray(w13), jnp.asarray(w2b), th


# ------------------------------------------------------------------------- forward pass

def feed_forward_pallas(x, w13, w2b, *, tm=None):
    """Forward pass on pre-fused weights.

    x:   (B, T, dim)
    w13: (n_h, dim, 2*th) from fuse_ffn_weights
    w2b: (n_h, th, dim)   from fuse_ffn_weights
    """
    B, T, dim = x.shape
    n_h, dim_w, two_th = w13.shape
    th = two_th // 2
    assert dim_w == dim and w2b.shape == (n_h, th, dim)

    itemsize = jnp.dtype(x.dtype).itemsize
    vmem_cap = _vmem_capacity_bytes()
    budget = max(vmem_cap - 16 * 1024 * 1024, 24 * 1024 * 1024)

    M = B * T
    if tm is None:
        tm = 16
        for cand in (1024, 768, 512, 384, 256, 128, 96, 64, 32, 16):
            if _vmem_bytes(cand, dim, th, itemsize) <= budget:
                tm = cand
                break

    # Shrink tm for small token counts; keep a multiple of 16 (bf16 sublane pack).
    tm_eff = min(tm, _round_up(M, 16))
    # Keep >= 2 M tiles when possible so the "parallel" axis can use v7x's 2nd core.
    if M > 16 and _round_up(M, tm_eff) // tm_eff < 2:
        tm_eff = _round_up(-(-M // 2), 16)
    M_pad = _round_up(M, tm_eff)
    n_m = M_pad // tm_eff

    x2d = x.reshape(M, dim)
    if M_pad != M:
        x2d = jnp.pad(x2d, ((0, M_pad - M), (0, 0)))

    # Generation-aware VMEM limit: honest footprint + compiler scratch, below physical.
    vmem_need = _vmem_bytes(tm_eff, dim, th, itemsize) + 8 * 1024 * 1024
    vmem_limit = int(min(max(vmem_need, 32 * 1024 * 1024), vmem_cap - 2 * 1024 * 1024))

    hidden_pad = n_h * th
    cost = pl.CostEstimate(
        flops=6 * M_pad * dim * hidden_pad,
        transcendentals=M_pad * hidden_pad,
        # weights are re-streamed once per M tile
        bytes_accessed=(2 * M_pad * dim + n_m * 3 * dim * hidden_pad) * itemsize,
    )

    kernel = functools.partial(_ffn_kernel, th=th)

    # TODO(synk): x / out blocks are constant along the hidden axis; a single-buffered
    # pipeline_mode (pl.Buffered(1)) there would reclaim ~2*tm*dim*itemsize of VMEM.
    out2d = pl.pallas_call(
        kernel,
        out_shape=jax.ShapeDtypeStruct((M_pad, dim), x.dtype),
        grid_spec=pltpu.PrefetchScalarGridSpec(
            num_scalar_prefetch=0,
            grid=(n_m, n_h),
            in_specs=[
                pl.BlockSpec((tm_eff, dim), lambda i, h: (i, 0)),        # x tile
                pl.BlockSpec((None, dim, 2 * th), lambda i, h: (h, 0, 0)),  # fused W13 tile
                pl.BlockSpec((None, th, dim), lambda i, h: (h, 0, 0)),      # W2^T tile
            ],
            out_specs=pl.BlockSpec((tm_eff, dim), lambda i, h: (i, 0)),
            scratch_shapes=[pltpu.VMEM((tm_eff, dim), jnp.float32)],
        ),
        compiler_params=pltpu.CompilerParams(
            dimension_semantics=("parallel", "arbitrary"),
            vmem_limit_bytes=vmem_limit,
        ),
        cost_estimate=cost,
    )(x2d, w13, w2b)

    if M_pad != M:
        out2d = out2d[:M]
    return out2d.reshape(B, T, dim)


# ------------------------------------------------------------------------------ module

def _compute_hidden_dim(dim, hidden_dim, multiple_of, ffn_dim_multiplier):
    hidden_dim = int(2 * hidden_dim / 3)
    if ffn_dim_multiplier is not None:
        hidden_dim = int(ffn_dim_multiplier * hidden_dim)
    return multiple_of * ((hidden_dim + multiple_of - 1) // multiple_of)


def _xavier_uniform(key, shape):
    # shape = (out_features, in_features), matching nn.Linear weight convention.
    fan_out, fan_in = shape
    bound = math.sqrt(6.0 / (fan_in + fan_out))
    return jax.random.uniform(key, shape, jnp.float32, -bound, bound)


def _reference_ffn(x, w1, w3, w2):
    """Pure-JAX reference with PyTorch (out, in) weight convention."""
    h1 = x @ w1.T
    h3 = x @ w3.T
    return (jax.nn.silu(h1) * h3) @ w2.T


if __name__ == "__main__":
    # Small shapes consistent with the module (kept tiny but tile-aligned).
    dim = 128
    hidden_arg = 768
    multiple_of = 128
    ffn_dim_multiplier = None
    hidden = _compute_hidden_dim(dim, hidden_arg, multiple_of, ffn_dim_multiplier)  # -> 512

    B, T = 2, 48   # M = 96: exercises M padding + the >=2-M-tiles split

    key = jax.random.PRNGKey(0)
    kx, k1, k2, k3 = jax.random.split(key, 4)

    x = jax.random.normal(kx, (B, T, dim), jnp.float32)
    # PyTorch nn.Linear weight shapes: w1 (hidden, dim), w3 (hidden, dim), w2 (dim, hidden).
    w1 = _xavier_uniform(k1, (hidden, dim))
    w3 = _xavier_uniform(k3, (hidden, dim))
    w2 = _xavier_uniform(k2, (dim, hidden))

    ref = _reference_ffn(x, w1, w3, w2)

    # ---- f32 path: th=256 -> 2 hidden tiles (exercises the reduction axis) -----------
    w13_a, w2b_a, th_a = fuse_ffn_weights(w1, w3, w2, th=256)   # fused ONCE, off hot path
    out = feed_forward_pallas(x, w13_a, w2b_a)
    out = jax.block_until_ready(out)
    assert out.shape == (B, T, dim)
    assert jnp.allclose(out, ref, atol=1e-4, rtol=1e-4), "f32 mismatch vs reference"

    # ---- f32 path with non-divisor th=384: exercises hidden zero-padding -------------
    w13_b, w2b_b, th_b = fuse_ffn_weights(w1, w3, w2, th=384)   # hidden 512 -> padded 768
    out_pad = feed_forward_pallas(x, w13_b, w2b_b, tm=64)
    out_pad = jax.block_until_ready(out_pad)
    assert jnp.allclose(out_pad, ref, atol=1e-4, rtol=1e-4), "padded-hidden mismatch"

    # ---- bf16 path (production regime) -----------------------------------------------
    w13_c, w2b_c, th_c = fuse_ffn_weights(
        w1.astype(jnp.bfloat16), w3.astype(jnp.bfloat16), w2.astype(jnp.bfloat16))
    out_bf16 = feed_forward_pallas(x.astype(jnp.bfloat16), w13_c, w2b_c)
    out_bf16 = jax.block_until_ready(out_bf16).astype(jnp.float32)
    assert jnp.allclose(out_bf16, ref, atol=1e-1, rtol=1e-1), "bf16 mismatch vs reference"

    print("KERNEL_OK")
</pallas_src>

<mosaic_0001>
module attributes {stable_mosaic.version = 11 : i64} {
  func.func @_ffn_kernel(%arg0: i32, %arg1: i32, %arg2: memref<48x128xf32, #tpu.memory_space<vmem>>, %arg3: memref<1x128x512xf32, #tpu.memory_space<vmem>>, %arg4: memref<1x256x128xf32, #tpu.memory_space<vmem>>, %arg5: memref<48x128xf32, #tpu.memory_space<vmem>>, %arg6: memref<48x128xf32, #tpu.memory_space<vmem>>) attributes {dimension_semantics = [#tpu.dimension_semantics<parallel>, #tpu.dimension_semantics<arbitrary>], iteration_bounds = array<i64: 2, 2>, scalar_prefetch = 0 : i64, scratch_operands = 1 : i64, tpu.core_type = #tpu.core_type<tc>, window_params = [{transform_indices = @transform_0, window_bounds = array<i64: 48, 128>}, {transform_indices = @transform_1, window_bounds = array<i64: 1, 128, 512>}, {transform_indices = @transform_2, window_bounds = array<i64: 1, 256, 128>}, {transform_indices = @transform_3, window_bounds = array<i64: 48, 128>}]} {
    %c0_i32 = arith.constant 0 : i32
    %0 = arith.cmpi eq, %arg1, %c0_i32 : i32
    %1 = arith.extui %0 : i1 to i32
    %c0_i32_0 = arith.constant 0 : i32
    %2 = arith.cmpi ne, %1, %c0_i32_0 : i32
    scf.if %2 {
      %cst_15 = arith.constant 0.000000e+00 : f32
      %25 = vector.broadcast %cst_15 : f32 to vector<48x128xf32>
      %c0_16 = arith.constant 0 : index
      %c0_17 = arith.constant 0 : index
      %26 = vector.load %arg6[%c0_16, %c0_17] : memref<48x128xf32, #tpu.memory_space<vmem>>, vector<48x128xf32>
      tpu.vector_store %arg6[%c0_16, %c0_17], %25 {strides = array<i32>} : memref<48x128xf32, #tpu.memory_space<vmem>>, vector<48x128xf32>,
    } else {
    }
    %c0 = arith.constant 0 : index
    %c0_1 = arith.constant 0 : index
    %3 = vector.load %arg2[%c0, %c0_1] : memref<48x128xf32, #tpu.memory_space<vmem>>, vector<48x128xf32>
    %c0_2 = arith.constant 0 : index
    %c0_3 = arith.constant 0 : index
    %c0_4 = arith.constant 0 : index
    %4 = vector.load %arg3[%c0_2, %c0_3, %c0_4] : memref<1x128x512xf32, #tpu.memory_space<vmem>>, vector<1x128x512xf32>
    %5 = vector.shape_cast %4 : vector<1x128x512xf32> to vector<128x512xf32>
    %cst = arith.constant dense<0.000000e+00> : vector<48x512xf32>
    %6 = tpu.matmul %3, %5, %cst {dimension_numbers = #tpu.dot_dimension_numbers<[1], [0], [0], [1], [0, 0, 1, 1], [], []>} : vector<48x128xf32>, vector<128x512xf32>, vector<48x512xf32> -> vector<48x512xf32>
    %7 = vector.extract_strided_slice %6 {offsets = [0, 0], sizes = [48, 256], strides = [1, 1]} : vector<48x512xf32> to vector<48x256xf32>
    %8 = vector.extract_strided_slice %6 {offsets = [0, 256], sizes = [48, 256], strides = [1, 1]} : vector<48x512xf32> to vector<48x256xf32>
    %9 = arith.negf %7 : vector<48x256xf32>
    %10 = math.exp %9 : vector<48x256xf32>
    %cst_5 = arith.constant 1.000000e+00 : f32
    %11 = vector.broadcast %cst_5 : f32 to vector<48x256xf32>
    %12 = arith.addf %11, %10 : vector<48x256xf32>
    %13 = arith.divf %11, %12 : vector<48x256xf32>
    %14 = arith.mulf %7, %13 : vector<48x256xf32>
    %15 = arith.mulf %14, %8 : vector<48x256xf32>
    %c0_6 = arith.constant 0 : index
    %c0_7 = arith.constant 0 : index
    %16 = vector.load %arg6[%c0_6, %c0_7] : memref<48x128xf32, #tpu.memory_space<vmem>>, vector<48x128xf32>
    %c0_8 = arith.constant 0 : index
    %c0_9 = arith.constant 0 : index
    %c0_10 = arith.constant 0 : index
    %17 = vector.load %arg4[%c0_8, %c0_9, %c0_10] : memref<1x256x128xf32, #tpu.memory_space<vmem>>, vector<1x256x128xf32>
    %18 = vector.shape_cast %17 : vector<1x256x128xf32> to vector<256x128xf32>
    %cst_11 = arith.constant dense<0.000000e+00> : vector<48x128xf32>
    %19 = tpu.matmul %15, %18, %cst_11 {dimension_numbers = #tpu.dot_dimension_numbers<[1], [0], [0], [1], [0, 0, 1, 1], [], []>} : vector<48x256xf32>, vector<256x128xf32>, vector<48x128xf32> -> vector<48x128xf32>
    %20 = arith.addf %16, %19 : vector<48x128xf32>
    %c0_12 = arith.constant 0 : index
    %c0_13 = arith.constant 0 : index
    %21 = vector.load %arg6[%c0_12, %c0_13] : memref<48x128xf32, #tpu.memory_space<vmem>>, vector<48x128xf32>
    tpu.vector_store %arg6[%c0_12, %c0_13], %20 {strides = array<i32>} : memref<48x128xf32, #tpu.memory_space<vmem>>, vector<48x128xf32>,
    %c1_i32 = arith.constant 1 : i32
    %22 = arith.cmpi eq, %arg1, %c1_i32 : i32
    %23 = arith.extui %22 : i1 to i32
    %c0_i32_14 = arith.constant 0 : i32
    %24 = arith.cmpi ne, %23, %c0_i32_14 : i32
    scf.if %24 {
      %c0_15 = arith.constant 0 : index
      %c0_16 = arith.constant 0 : index
      %25 = vector.load %arg6[%c0_15, %c0_16] : memref<48x128xf32, #tpu.memory_space<vmem>>, vector<48x128xf32>
      %c0_17 = arith.constant 0 : index
      %c0_18 = arith.constant 0 : index
      %26 = vector.load %arg5[%c0_17, %c0_18] : memref<48x128xf32, #tpu.memory_space<vmem>>, vector<48x128xf32>
      tpu.vector_store %arg5[%c0_17, %c0_18], %25 {strides = array<i32>} : memref<48x128xf32, #tpu.memory_space<vmem>>, vector<48x128xf32>,
    } else {
    }
    return
  }
  func.func @transform_0(%arg0: i32, %arg1: i32) -> (i32, i32) {
    %c0_i32 = arith.constant 0 : i32
    %c0_i32_0 = arith.constant 0 : i32
    return %arg0, %c0_i32 : i32, i32
  }
  func.func @transform_1(%arg0: i32, %arg1: i32) -> (i32, i32, i32) {
    %c0_i32 = arith.constant 0 : i32
    %c0_i32_0 = arith.constant 0 : i32
    %c0_i32_1 = arith.constant 0 : i32
    return %arg1, %c0_i32, %c0_i32_0 : i32, i32, i32
  }
  func.func @transform_2(%arg0: i32, %arg1: i32) -> (i32, i32, i32) {
    %c0_i32 = arith.constant 0 : i32
    %c0_i32_0 = arith.constant 0 : i32
    %c0_i32_1 = arith.constant 0 : i32
    return %arg1, %c0_i32, %c0_i32_0 : i32, i32, i32
  }
  func.func @transform_3(%arg0: i32, %arg1: i32) -> (i32, i32) {
    %c0_i32 = arith.constant 0 : i32
    %c0_i32_0 = arith.constant 0 : i32
    return %arg0, %c0_i32 : i32, i32
  }
}

</mosaic_0001>

<llo_original>
// kernel: tpu_custom_call.1
$region0: #{tpu_custom_call.1}
  #allocation0 [shape = 'u32[]', space=smem, size = 0x4, offset = 0x4, fixed_abs, tag = 'smem constant byte address 0x4 - core index']
  #allocation1 [shape = 'u32[144,128]{1,0:T(1,128)}', space=vmem, size = 0x12000, scoped, tag = 'internal scratch']
  #allocation2 [shape = 'f32[48,128]{1,0:T(8,128)}', space=vmem, size = 0x6000, scoped, tag = 'scratch operand']
  %s0 = inlined_call_operand.hbm [shape: f32[96,128], index: 0, kind: input, shape index: {}]
  %s1 = inlined_call_operand.hbm [shape: f32[2,128,512], index: 1, kind: input, shape index: {}]
  %s2 = inlined_call_operand.hbm [shape: f32[2,256,128], index: 2, kind: input, shape index: {}]
  %s3 = inlined_call_operand.hbm [shape: f32[96,128], index: 3, kind: output, shape index: {}]
  %s4 = sld [smem:[#allocation0]]
  $region65: #{tpu_custom_call.1} parent=0
    _
  %s6 = ssub.s32 1, %s4
  %s7 = scalar_select 0, %s6, %s4
  $region1: #{tpu_custom_call.1} parent=0
    #allocation3 [shape = 'u8[49152]{0}', space=vmem, size = 0xc000, scoped, tag = 'input window, operand 0']
    #allocation4 [shape = 's32[2]{0}', space=sflag, size = 0x8, scoped, tag = 'scoped memory for tpu_custom_call.1']
    #allocation5 [shape = 's32[2]{0}', space=sflag, size = 0x8, scoped, tag = 'scoped memory for tpu_custom_call.1']
    #allocation6 [shape = 'u8[524288]{0}', space=vmem, size = 0x80000, scoped, tag = 'input window, operand 1']
    #allocation7 [shape = 's32[2]{0}', space=sflag, size = 0x8, scoped, tag = 'scoped memory for tpu_custom_call.1']
    #allocation8 [shape = 'u8[262144]{0}', space=vmem, size = 0x40000, scoped, tag = 'input window, operand 2']
    #allocation9 [shape = 'u8[49152]{0}', space=vmem, size = 0xc000, scoped, tag = 'output window, operand 0']
    %8 = vsyncpa [#allocation4], 0
    %s9 = scalar_lea.sflag [#allocation4], 1
    %10 = vsyncpa %s9, 0
    %11 = vsyncpa [#allocation7], 0
    %s12 = scalar_lea.sflag [#allocation7], 1
    %13 = vsyncpa %s12, 0
    %14 = vsyncpa [#allocation5], 0
    %s15 = scalar_lea.sflag [#allocation5], 1
    %16 = vsyncpa %s15, 0
    loop: start=0, step=1, limit=6
    $region2: #{tpu_custom_call.1} parent=1 // loop_pre_header
      _
    $region3: #{tpu_custom_call.1} parent=1 // loop_header
      %s18 = sphi 0, %s22
      %p19 = scmp.ge.s32.totalorder %s18, 6
      %s25 = sphi 0, %s37
      %s26 = sphi 0, %s33
      %s27 = sphi 0, %s25
      %s28 = sphi 0, %s26
      %s29 = sphi 0, %s27
      %s30 = sphi 0, %s28
      %s40 = sphi 0, %s42
      %s43 = sphi 0, %s40
      %s44 = sphi 0, %s43
      %s60 = sphi 0, %s44
      %s66 = sphi 0, %s68
      %s69 = sphi 0, %s66
      %s70 = sphi 0, %s69
      %s86 = sphi 0, %s70
      %s92 = sphi 0, %s94
      %s95 = sphi 0, %s92
      %s96 = sphi 0, %s95
      %s112 = sphi 0, %s96
      %s118 = sphi 0, %s120
      %s121 = sphi 0, %s118
      %s122 = sphi 0, %s121
      %s138 = sphi 0, %s122
    $region4: #{tpu_custom_call.1} parent=1 // loop_header_branch
      %21 = sbr.rel (%p19) target = $region8
    $region5: #{tpu_custom_call.1} parent=1 // loop_body
      %s23 = ssub.s32 %s18, 1
      %s24 = ssub.s32 %s18, 2
      %s31 = sadd.s32 1, %s26
      %p32 = scmp.ge.s32.totalorder %s31, 2
      %s33 = scalar_select %p32, 0, %s31
      %s34 = sadd.s32 1, %s25
      %s35 = scalar_select %p32, %s34, %s25
      %p36 = scmp.ge.s32.totalorder %s35, 2
      %s37 = scalar_select %p36, 0, %s35
      %s38 = ssub.s32 %s25, %s37
      %p39 = scmp.eq.s32.totalorder %s38, 0
      %s41 = sadd.s32 %s40, 1
      %s42 = scalar_select %p39, %s40, %s41
      %p45 = pneg %p39
      %p46 = scmp.eq.s32.totalorder %s18, 3
      %p47 = por %p45, %p46
      %p48 = scmp.ne.s32.totalorder %s40, %s43
      %p49 = scmp.eq.s32.totalorder %s18, 0
      %p50 = por %p48, %p49
      %p51 = scmp.ne.s32.totalorder %s40, %s43
      %p52 = scmp.eq.s32.totalorder %s23, 3
      %p53 = por %p51, %p52
      %p54 = scmp.ne.s32.totalorder %s43, %s44
      %p55 = scmp.eq.s32.totalorder %s23, 0
      %p56 = por %p54, %p55
      %p57 = scmp.ne.s32.totalorder %s43, %s44
      %p58 = scmp.eq.s32.totalorder %s24, 3
      %p59 = por %p57, %p58
      %p61 = scmp.ne.s32.totalorder %s44, %s60
      %p62 = scmp.eq.s32.totalorder %s24, 0
      %p63 = por %p61, %p62
      %s64 = ssub.s32 %s26, %s33
      %p65 = scmp.eq.s32.totalorder %s64, 0
      %s67 = sadd.s32 %s66, 1
      %s68 = scalar_select %p65, %s66, %s67
      %p71 = pneg %p65
      %p72 = scmp.eq.s32.totalorder %s18, 3
      %p73 = por %p71, %p72
      %p74 = scmp.ne.s32.totalorder %s66, %s69
      %p75 = scmp.eq.s32.totalorder %s18, 0
      %p76 = por %p74, %p75
      %p77 = scmp.ne.s32.totalorder %s66, %s69
      %p78 = scmp.eq.s32.totalorder %s23, 3
      %p79 = por %p77, %p78
      %p80 = scmp.ne.s32.totalorder %s69, %s70
      %p81 = scmp.eq.s32.totalorder %s23, 0
      %p82 = por %p80, %p81
      %p83 = scmp.ne.s32.totalorder %s69, %s70
      %p84 = scmp.eq.s32.totalorder %s24, 3
      %p85 = por %p83, %p84
      %p87 = scmp.ne.s32.totalorder %s70, %s86
      %p88 = scmp.eq.s32.totalorder %s24, 0
      %p89 = por %p87, %p88
      %s90 = ssub.s32 %s26, %s33
      %p91 = scmp.eq.s32.totalorder %s90, 0
      %s93 = sadd.s32 %s92, 1
      %s94 = scalar_select %p91, %s92, %s93
      %p97 = pneg %p91
      %p98 = scmp.eq.s32.totalorder %s18, 3
      %p99 = por %p97, %p98
      %p100 = scmp.ne.s32.totalorder %s92, %s95
      %p101 = scmp.eq.s32.totalorder %s18, 0
      %p102 = por %p100, %p101
      %p103 = scmp.ne.s32.totalorder %s92, %s95
      %p104 = scmp.eq.s32.totalorder %s23, 3
      %p105 = por %p103, %p104
      %p106 = scmp.ne.s32.totalorder %s95, %s96
      %p107 = scmp.eq.s32.totalorder %s23, 0
      %p108 = por %p106, %p107
      %p109 = scmp.ne.s32.totalorder %s95, %s96
      %p110 = scmp.eq.s32.totalorder %s24, 3
      %p111 = por %p109, %p110
      %p113 = scmp.ne.s32.totalorder %s96, %s112
      %p114 = scmp.eq.s32.totalorder %s24, 0
      %p115 = por %p113, %p114
      %s116 = ssub.s32 %s25, %s37
      %p117 = scmp.eq.s32.totalorder %s116, 0
      %s119 = sadd.s32 %s118, 1
      %s120 = scalar_select %p117, %s118, %s119
      %p123 = pneg %p117
      %p124 = scmp.eq.s32.totalorder %s18, 3
      %p125 = por %p123, %p124
      %p126 = scmp.ne.s32.totalorder %s118, %s121
      %p127 = scmp.eq.s32.totalorder %s18, 0
      %p128 = por %p126, %p127
      %p129 = scmp.ne.s32.totalorder %s118, %s121
      %p130 = scmp.eq.s32.totalorder %s23, 3
      %p131 = por %p129, %p130
      %p132 = scmp.ne.s32.totalorder %s121, %s122
      %p133 = scmp.eq.s32.totalorder %s23, 0
      %p134 = por %p132, %p133
      %p135 = scmp.ne.s32.totalorder %s121, %s122
      %p136 = scmp.eq.s32.totalorder %s24, 3
      %p137 = por %p135, %p136
      %p139 = scmp.ne.s32.totalorder %s122, %s138
      %p140 = scmp.eq.s32.totalorder %s24, 0
      %p141 = por %p139, %p140
      %p142 = scmp.le.s32.totalorder 1, %s18
      %p143 = scmp.lt.s32.totalorder %s18, 5
      %p144 = pnand %p142, %p143
      %p145 = pneg %p144
      // Predicated region
      $region9: #{tpu_custom_call.1} parent=5 // pred_check
        _
      $region10: #{tpu_custom_call.1} parent=5 // pred_check_branch
        %147 = sbr.rel (%p144) target = $region12
      $region11: #{tpu_custom_call.1} parent=5 // pred_region
        %s148 = ssub.s32 %s18, 1
      $region12: #{tpu_custom_call.1} parent=5 // pred_fallthru
        _
      %p149 = scmp.lt.s32.totalorder %s18, 4
      // Predicated region
      $region13: #{tpu_custom_call.1} parent=5 // pred_check
        %p150 = pneg %p149
      $region14: #{tpu_custom_call.1} parent=5 // pred_check_branch
        %152 = sbr.rel (%p150) target = $region16
      $region15: #{tpu_custom_call.1} parent=5 // pred_region
        // Predicated region
        $region17: #{tpu_custom_call.1} parent=15 // pred_check
          %p153 = pneg %p50
        $region18: #{tpu_custom_call.1} parent=15 // pred_check_branch
          %155 = sbr.rel (%p153) target = $region20
        $region19: #{tpu_custom_call.1} parent=15 // pred_region
          %s156 = sand.u32 %s40, 1
          %s157 = scalar_lea.sflag [#allocation4], %s156
          %s158 = sand.u32 %s40, 1
          %s159 = smul.addr %s158, 48
          %s160 = scalar_lea.vmem [#allocation3], %s159
          %s161 = smul.u32 6, %s25
          %s163 = ssub.s32 768, 768
          %164 = vsyncadd %s157, %s163
          %s165 = smul.addr %s161, 128
          %s166 = scalar_lea.hbm %s0, %s165
          %s167 = sshll.u32 %s160, 4
          %s168 = int_to_ptr.vmem [resolvable:$true] %s167
          %173 = dma.hbm_to_vmem [thread:$0]  %s166, 768, %s168, %s157, 128, 128, 8
        $region20: #{tpu_custom_call.1} parent=15 // pred_fallthru
          _
        // Predicated region
        $region21: #{tpu_custom_call.1} parent=15 // pred_check
          %p174 = pneg %p76
        $region22: #{tpu_custom_call.1} parent=15 // pred_check_branch
          %176 = sbr.rel (%p174) target = $region24
        $region23: #{tpu_custom_call.1} parent=15 // pred_region
          %s177 = sand.u32 %s18, 1
          %s178 = scalar_lea.sflag [#allocation7], %s177
          %s179 = sand.u32 %s66, 1
          %s180 = smul.addr %s179, 512
          %s181 = scalar_lea.vmem [#allocation6], %s180
          %s183 = ssub.s32 8192, 8192
          %184 = vsyncadd %s178, %s183
          %s185 = smul.addr %s26, 64
          %s186 = smul.addr %s185, 128
          %s187 = scalar_lea.hbm %s1, %s186
          %s188 = sshll.u32 %s181, 4
          %s189 = int_to_ptr.vmem [resolvable:$true] %s188
          %194 = dma.hbm_to_vmem [thread:$0]  %s187, 8192, %s189, %s178, 512, 512, 32
        $region24: #{tpu_custom_call.1} parent=15 // pred_fallthru
          _
        // Predicated region
        $region25: #{tpu_custom_call.1} parent=15 // pred_check
          %p195 = pneg %p102
        $region26: #{tpu_custom_call.1} parent=15 // pred_check_branch
          %197 = sbr.rel (%p195) target = $region28
        $region27: #{tpu_custom_call.1} parent=15 // pred_region
          %s198 = sand.u32 %s18, 1
          %s199 = scalar_lea.sflag [#allocation7], %s198
          %s200 = sand.u32 %s92, 1
          %s201 = smul.addr %s200, 256
          %s202 = scalar_lea.vmem [#allocation8], %s201
          %s204 = ssub.s32 4096, 4096
          %205 = vsyncadd %s199, %s204
          %s206 = smul.addr %s26, 32
          %s207 = smul.addr %s206, 128
          %s208 = scalar_lea.hbm %s2, %s207
          %s209 = sshll.u32 %s202, 4
          %s210 = int_to_ptr.vmem [resolvable:$true] %s209
          %215 = dma.hbm_to_vmem [thread:$0]  %s208, 4096, %s210, %s199, 128, 128, 8
        $region28: #{tpu_custom_call.1} parent=15 // pred_fallthru
          _
      $region16: #{tpu_custom_call.1} parent=5 // pred_fallthru
        _
      %p216 = scmp.le.s32.totalorder 1, %s18
      %p217 = scmp.lt.s32.totalorder %s18, 5
      %p218 = pnand %p216, %p217
      %p219 = pneg %p218
      // Predicated region
      $region29: #{tpu_custom_call.1} parent=5 // pred_check
        _
      $region30: #{tpu_custom_call.1} parent=5 // pred_check_branch
        %221 = sbr.rel (%p218) target = $region32
      $region31: #{tpu_custom_call.1} parent=5 // pred_region
        %s222 = ssub.s32 %s18, 1
        %s223 = sand.u32 %s43, 1
        %s224 = scalar_lea.sflag [#allocation4], %s223
        %s225 = sand.u32 %s43, 1
        %s226 = smul.addr %s225, 48
        %s227 = scalar_lea.vmem [#allocation3], %s226
        // Predicated region
        $region33: #{tpu_custom_call.1} parent=31 // pred_check
          %p228 = pneg %p56
        $region34: #{tpu_custom_call.1} parent=31 // pred_check_branch
          %230 = sbr.rel (%p228) target = $region36
        $region35: #{tpu_custom_call.1} parent=31 // pred_region
          %231 = dma.done %s224, 768
        $region36: #{tpu_custom_call.1} parent=31 // pred_fallthru
          _
        %s232 = sand.u32 %s23, 1
        %s233 = scalar_lea.sflag [#allocation7], %s232
        %s234 = sand.u32 %s69, 1
        %s235 = smul.addr %s234, 512
        %s236 = scalar_lea.vmem [#allocation6], %s235
        // Predicated region
        $region37: #{tpu_custom_call.1} parent=31 // pred_check
          %p237 = pneg %p82
        $region38: #{tpu_custom_call.1} parent=31 // pred_check_branch
          %239 = sbr.rel (%p237) target = $region40
        $region39: #{tpu_custom_call.1} parent=31 // pred_region
          %240 = dma.done %s233, 8192
        $region40: #{tpu_custom_call.1} parent=31 // pred_fallthru
          _
        %s241 = sand.u32 %s23, 1
        %s242 = scalar_lea.sflag [#allocation7], %s241
        %s243 = sand.u32 %s95, 1
        %s244 = smul.addr %s243, 256
        %s245 = scalar_lea.vmem [#allocation8], %s244
        // Predicated region
        $region41: #{tpu_custom_call.1} parent=31 // pred_check
          %p246 = pneg %p108
        $region42: #{tpu_custom_call.1} parent=31 // pred_check_branch
          %248 = sbr.rel (%p246) target = $region44
        $region43: #{tpu_custom_call.1} parent=31 // pred_region
          %249 = dma.done %s242, 4096
        $region44: #{tpu_custom_call.1} parent=31 // pred_fallthru
          _
        %s250 = sand.u32 %s43, 1
        %s251 = scalar_lea.sflag [#allocation4], %s250
        %s252 = sand.u32 %s43, 1
        %s253 = smul.addr %s252, 48
        %s254 = scalar_lea.vmem [#allocation3], %s253
        %p255 = pneg %p56
        %p256 = pneg %p53
        %s257 = sand.u32 %s23, 1
        %s258 = scalar_lea.sflag [#allocation7], %s257
        %s259 = sand.u32 %s69, 1
        %s260 = smul.addr %s259, 512
        %s261 = scalar_lea.vmem [#allocation6], %s260
        %p262 = pneg %p82
        %p263 = pneg %p79
        %s264 = sand.u32 %s23, 1
        %s265 = scalar_lea.sflag [#allocation7], %s264
        %s266 = sand.u32 %s95, 1
        %s267 = smul.addr %s266, 256
        %s268 = scalar_lea.vmem [#allocation8], %s267
        %p269 = pneg %p108
        %p270 = pneg %p105
        %p271 = pneg %p134
        %p272 = pneg %p131
        %s273 = sand.u32 %s121, 1
        %s274 = scalar_lea.sflag [#allocation5], %s273
        %s275 = sand.u32 %s121, 1
        %s276 = smul.addr %s275, 48
        %s277 = scalar_lea.vmem [#allocation9], %s276
        %s278 = smul.u32 6, %s27
        %s279 = smul.u32 6, %s27
        %p280 = scmp.eq.s32.totalorder %s28, 0
        // Predicated region
        $region45: #{tpu_custom_call.1} parent=31 // pred_check
          %p281 = pneg %p280
        $region46: #{tpu_custom_call.1} parent=31 // pred_check_branch
          %283 = sbr.rel (%p281) target = $region48
        $region47: #{tpu_custom_call.1} parent=31 // pred_region
          %284 = vst [vmem:[#allocation2] sm:$0xff] 0.0
          %285 = vst [vmem:[#allocation2 + $0x8] sm:$0xff] 0.0
          %286 = vst [vmem:[#allocation2 + $0x10] sm:$0xff] 0.0
          %287 = vst [vmem:[#allocation2 + $0x18] sm:$0xff] 0.0
          %288 = vst [vmem:[#allocation2 + $0x20] sm:$0xff] 0.0
          %289 = vst [vmem:[#allocation2 + $0x28] sm:$0xff] 0.0
        $region48: #{tpu_custom_call.1} parent=31 // pred_fallthru
          _
        %v290 = vld [vmem:[%s227] sm:$0xff]
        %v291 = vld [vmem:[%s227 + $0x8] sm:$0xff]
        %v292 = vld [vmem:[%s227 + $0x10] sm:$0xff]
        %v293 = vld [vmem:[%s227 + $0x18] sm:$0xff]
        %v294 = vld [vmem:[%s227 + $0x20] sm:$0xff]
        %v295 = vld [vmem:[%s227 + $0x28] sm:$0xff]
        %v296 = vld [vmem:[%s236] sm:$0xff]
        %v297 = vld [vmem:[%s236 + $0x8] sm:$0xff]
        %v298 = vld [vmem:[%s236 + $0x10] sm:$0xff]
        %v299 = vld [vmem:[%s236 + $0x18] sm:$0xff]
        %v300 = vld [vmem:[%s236 + $0x20] sm:$0xff]
        %v301 = vld [vmem:[%s236 + $0x28] sm:$0xff]
        %v302 = vld [vmem:[%s236 + $0x30] sm:$0xff]
        %v303 = vld [vmem:[%s236 + $0x38] sm:$0xff]
        %v304 = vld [vmem:[%s236 + $0x40] sm:$0xff]
        %v305 = vld [vmem:[%s236 + $0x48] sm:$0xff]
        %v306 = vld [vmem:[%s236 + $0x50] sm:$0xff]
        %v307 = vld [vmem:[%s236 + $0x58] sm:$0xff]
        %v308 = vld [vmem:[%s236 + $0x60] sm:$0xff]
        %v309 = vld [vmem:[%s236 + $0x68] sm:$0xff]
        %v310 = vld [vmem:[%s236 + $0x70] sm:$0xff]
        %v311 = vld [vmem:[%s236 + $0x78] sm:$0xff]
        %v312 = vld [vmem:[%s236 + $0x80] sm:$0xff]
        %v313 = vld [vmem:[%s236 + $0x88] sm:$0xff]
        %v314 = vld [vmem:[%s236 + $0x90] sm:$0xff]
        %v315 = vld [vmem:[%s236 + $0x98] sm:$0xff]
        %v316 = vld [vmem:[%s236 + $0xa0] sm:$0xff]
        %v317 = vld [vmem:[%s236 + $0xa8] sm:$0xff]
        %v318 = vld [vmem:[%s236 + $0xb0] sm:$0xff]
        %v319 = vld [vmem:[%s236 + $0xb8] sm:$0xff]
        %v320 = vld [vmem:[%s236 + $0xc0] sm:$0xff]
        %v321 = vld [vmem:[%s236 + $0xc8] sm:$0xff]
        %v322 = vld [vmem:[%s236 + $0xd0] sm:$0xff]
        %v323 = vld [vmem:[%s236 + $0xd8] sm:$0xff]
        %v324 = vld [vmem:[%s236 + $0xe0] sm:$0xff]
        %v325 = vld [vmem:[%s236 + $0xe8] sm:$0xff]
        %v326 = vld [vmem:[%s236 + $0xf0] sm:$0xff]
        %v327 = vld [vmem:[%s236 + $0xf8] sm:$0xff]
        %v328 = vld [vmem:[%s236 + $0x100] sm:$0xff]
        %v329 = vld [vmem:[%s236 + $0x108] sm:$0xff]
        %v330 = vld [vmem:[%s236 + $0x110] sm:$0xff]
        %v331 = vld [vmem:[%s236 + $0x118] sm:$0xff]
        %v332 = vld [vmem:[%s236 + $0x120] sm:$0xff]
        %v333 = vld [vmem:[%s236 + $0x128] sm:$0xff]
        %v334 = vld [vmem:[%s236 + $0x130] sm:$0xff]
        %v335 = vld [vmem:[%s236 + $0x138] sm:$0xff]
        %v336 = vld [vmem:[%s236 + $0x140] sm:$0xff]
        %v337 = vld [vmem:[%s236 + $0x148] sm:$0xff]
        %v338 = vld [vmem:[%s236 + $0x150] sm:$0xff]
        %v339 = vld [vmem:[%s236 + $0x158] sm:$0xff]
        %v340 = vld [vmem:[%s236 + $0x160] sm:$0xff]
        %v341 = vld [vmem:[%s236 + $0x168] sm:$0xff]
        %v342 = vld [vmem:[%s236 + $0x170] sm:$0xff]
        %v343 = vld [vmem:[%s236 + $0x178] sm:$0xff]
        %v344 = vld [vmem:[%s236 + $0x180] sm:$0xff]
        %v345 = vld [vmem:[%s236 + $0x188] sm:$0xff]
        %v346 = vld [vmem:[%s236 + $0x190] sm:$0xff]
        %v347 = vld [vmem:[%s236 + $0x198] sm:$0xff]
        %v348 = vld [vmem:[%s236 + $0x1a0] sm:$0xff]
        %v349 = vld [vmem:[%s236 + $0x1a8] sm:$0xff]
        %v350 = vld [vmem:[%s236 + $0x1b0] sm:$0xff]
        %v351 = vld [vmem:[%s236 + $0x1b8] sm:$0xff]
        %v352 = vld [vmem:[%s236 + $0x1c0] sm:$0xff]
        %v353 = vld [vmem:[%s236 + $0x1c8] sm:$0xff]
        %v354 = vld [vmem:[%s236 + $0x1d0] sm:$0xff]
        %v355 = vld [vmem:[%s236 + $0x1d8] sm:$0xff]
        %v356 = vld [vmem:[%s236 + $0x1e0] sm:$0xff]
        %v357 = vld [vmem:[%s236 + $0x1e8] sm:$0xff]
        %v358 = vld [vmem:[%s236 + $0x1f0] sm:$0xff]
        %v359 = vld [vmem:[%s236 + $0x1f8] sm:$0xff]
        %360 = vmatprep.subr.mxu0 %v357
        %361 = vmatpush1.msra.mxu0 %v356
        %362 = vmatprep.subr.mxu0 %v353
        %363 = vmatpush1.msra.mxu0 %v352
        %364 = vmatprep.subr.mxu0 %v349
        %365 = vmatpush1.msra.mxu0 %v348
        %366 = vmatprep.subr.mxu0 %v345
        %367 = vmatpush1.msra.mxu0 %v344
        %368 = vmatprep.subr.mxu0 %v341
        %369 = vmatpush1.msra.mxu0 %v340
        %370 = vmatprep.subr.mxu0 %v337
        %371 = vmatpush1.msra.mxu0 %v336
        %372 = vmatprep.subr.mxu0 %v333
        %373 = vmatpush1.msra.mxu0 %v332
        %374 = vmatprep.subr.mxu0 %v329
        %375 = vmatpush1.msra.mxu0 %v328
        %376 = vmatprep.subr.mxu0 %v325
        %377 = vmatpush1.msra.mxu0 %v324
        %378 = vmatprep.subr.mxu0 %v321
        %379 = vmatpush1.msra.mxu0 %v320
        %380 = vmatprep.subr.mxu0 %v317
        %381 = vmatpush1.msra.mxu0 %v316
        %382 = vmatprep.subr.mxu0 %v313
        %383 = vmatpush1.msra.mxu0 %v312
        %384 = vmatprep.subr.mxu0 %v309
        %385 = vmatpush1.msra.mxu0 %v308
        %386 = vmatprep.subr.mxu0 %v305
        %387 = vmatpush1.msra.mxu0 %v304
        %388 = vmatprep.subr.mxu0 %v301
        %389 = vmatpush1.msra.mxu0 %v300
        %390 = vmatprep.subr.mxu0 %v297
        %391 = vmatpush1.msra.mxu0 %v296
        %392 = vmatprep.subr.mxu0 0.0
        %393 = vmatpush2.msra.mxu0 0.0
        %394 = vmatprep.subr.mxu0 0.0
        %395 = vmatpush2.msra.mxu0 0.0
        %396 = vmatprep.subr.mxu0 0.0
        %397 = vmatpush2.msra.mxu0 0.0
        %398 = vmatprep.subr.mxu0 0.0
        %399 = vmatpush2.msra.mxu0 0.0
        %400 = vmatprep.subr.mxu0 0.0
        %401 = vmatpush2.msra.mxu0 0.0
        %402 = vmatprep.subr.mxu0 0.0
        %403 = vmatpush2.msra.mxu0 0.0
        %404 = vmatprep.subr.mxu0 0.0
        %405 = vmatpush2.msra.mxu0 0.0
        %406 = vmatprep.subr.mxu0 0.0
        %407 = vmatpush2.msra.mxu0 0.0
        %408 = vmatprep.subr.mxu0 0.0
        %409 = vmatpush2.msra.mxu0 0.0
        %410 = vmatprep.subr.mxu0 0.0
        %411 = vmatpush2.msra.mxu0 0.0
        %412 = vmatprep.subr.mxu0 0.0
        %413 = vmatpush2.msra.mxu0 0.0
        %414 = vmatprep.subr.mxu0 0.0
        %415 = vmatpush2.msra.mxu0 0.0
        %416 = vmatprep.subr.mxu0 0.0
        %417 = vmatpush2.msra.mxu0 0.0
        %418 = vmatprep.subr.mxu0 0.0
        %419 = vmatpush2.msra.mxu0 0.0
        %420 = vmatprep.subr.mxu0 0.0
        %421 = vmatpush2.msra.mxu0 0.0
        %422 = vmatprep.subr.mxu0 0.0
        %423 = vmatpush2.msra.mxu0 0.0
        %424 = vmatprep.mubr.f32.mxu0 0.0
        %425 = vmatmul.mubr.f32.gmra.mxu0 %v290
        %v426 = vpop.f32.mrf.mxu0
        %v427 = vadd.f32 0.0, %v426
        %v428 = vpop.f32.mrf.mxu0
        %v429 = vadd.f32 0.0, %v428
        %430 = vmatprep.mubr.f32.mxu0 0.0
        %431 = vmatmul.mubr.f32.gmra.mxu0 %v291
        %v432 = vpop.f32.mrf.mxu0
        %v433 = vadd.f32 0.0, %v432
        %v434 = vpop.f32.mrf.mxu0
        %v435 = vadd.f32 0.0, %v434
        %436 = vmatprep.mubr.f32.mxu0 0.0
        %437 = vmatmul.mubr.f32.gmra.mxu0 %v292
        %v438 = vpop.f32.mrf.mxu0
        %v439 = vadd.f32 0.0, %v438
        %v440 = vpop.f32.mrf.mxu0
        %v441 = vadd.f32 0.0, %v440
        %442 = vmatprep.mubr.f32.mxu0 0.0
        %443 = vmatmul.mubr.f32.gmra.mxu0 %v293
        %v444 = vpop.f32.mrf.mxu0
        %v445 = vadd.f32 0.0, %v444
        %v446 = vpop.f32.mrf.mxu0
        %v447 = vadd.f32 0.0, %v446
        %448 = vmatprep.mubr.f32.mxu0 0.0
        %449 = vmatmul.mubr.f32.gmra.mxu0 %v294
        %v450 = vpop.f32.mrf.mxu0
        %v451 = vadd.f32 0.0, %v450
        %v452 = vpop.f32.mrf.mxu0
        %v453 = vadd.f32 0.0, %v452
        %454 = vmatprep.mubr.f32.mxu0 0.0
        %455 = vmatmul.mubr.f32.gmra.mxu0 %v295
        %v456 = vpop.f32.mrf.mxu0
        %v457 = vadd.f32 0.0, %v456
        %v458 = vpop.f32.mrf.mxu0
        %v459 = vadd.f32 0.0, %v458
        %460 = vdwg.mxu0
        %461 = vmatprep.subr.mxu0 %v359
        %462 = vmatpush1.msra.mxu0 %v358
        %463 = vmatprep.subr.mxu0 %v355
        %464 = vmatpush1.msra.mxu0 %v354
        %465 = vmatprep.subr.mxu0 %v351
        %466 = vmatpush1.msra.mxu0 %v350
        %467 = vmatprep.subr.mxu0 %v347
        %468 = vmatpush1.msra.mxu0 %v346
        %469 = vmatprep.subr.mxu0 %v343
        %470 = vmatpush1.msra.mxu0 %v342
        %471 = vmatprep.subr.mxu0 %v339
        %472 = vmatpush1.msra.mxu0 %v338
        %473 = vmatprep.subr.mxu0 %v335
        %474 = vmatpush1.msra.mxu0 %v334
        %475 = vmatprep.subr.mxu0 %v331
        %476 = vmatpush1.msra.mxu0 %v330
        %477 = vmatprep.subr.mxu0 %v327
        %478 = vmatpush1.msra.mxu0 %v326
        %479 = vmatprep.subr.mxu0 %v323
        %480 = vmatpush1.msra.mxu0 %v322
        %481 = vmatprep.subr.mxu0 %v319
        %482 = vmatpush1.msra.mxu0 %v318
        %483 = vmatprep.subr.mxu0 %v315
        %484 = vmatpush1.msra.mxu0 %v314
        %485 = vmatprep.subr.mxu0 %v311
        %486 = vmatpush1.msra.mxu0 %v310
        %487 = vmatprep.subr.mxu0 %v307
        %488 = vmatpush1.msra.mxu0 %v306
        %489 = vmatprep.subr.mxu0 %v303
        %490 = vmatpush1.msra.mxu0 %v302
        %491 = vmatprep.subr.mxu0 %v299
        %492 = vmatpush1.msra.mxu0 %v298
        %493 = vmatprep.subr.mxu0 0.0
        %494 = vmatpush2.msra.mxu0 0.0
        %495 = vmatprep.subr.mxu0 0.0
        %496 = vmatpush2.msra.mxu0 0.0
        %497 = vmatprep.subr.mxu0 0.0
        %498 = vmatpush2.msra.mxu0 0.0
        %499 = vmatprep.subr.mxu0 0.0
        %500 = vmatpush2.msra.mxu0 0.0
        %501 = vmatprep.subr.mxu0 0.0
        %502 = vmatpush2.msra.mxu0 0.0
        %503 = vmatprep.subr.mxu0 0.0
        %504 = vmatpush2.msra.mxu0 0.0
        %505 = vmatprep.subr.mxu0 0.0
        %506 = vmatpush2.msra.mxu0 0.0
        %507 = vmatprep.subr.mxu0 0.0
        %508 = vmatpush2.msra.mxu0 0.0
        %509 = vmatprep.subr.mxu0 0.0
        %510 = vmatpush2.msra.mxu0 0.0
        %511 = vmatprep.subr.mxu0 0.0
        %512 = vmatpush2.msra.mxu0 0.0
        %513 = vmatprep.subr.mxu0 0.0
        %514 = vmatpush2.msra.mxu0 0.0
        %515 = vmatprep.subr.mxu0 0.0
        %516 = vmatpush2.msra.mxu0 0.0
        %517 = vmatprep.subr.mxu0 0.0
        %518 = vmatpush2.msra.mxu0 0.0
        %519 = vmatprep.subr.mxu0 0.0
        %520 = vmatpush2.msra.mxu0 0.0
        %521 = vmatprep.subr.mxu0 0.0
        %522 = vmatpush2.msra.mxu0 0.0
        %523 = vmatprep.subr.mxu0 0.0
        %524 = vmatpush2.msra.mxu0 0.0
        %525 = vmatprep.mubr.f32.mxu0 0.0
        %526 = vmatmul.mubr.f32.gmra.mxu0 %v290
        %v527 = vpop.f32.mrf.mxu0
        %v528 = vadd.f32 0.0, %v527
        %v529 = vpop.f32.mrf.mxu0
        %v530 = vadd.f32 0.0, %v529
        %531 = vmatprep.mubr.f32.mxu0 0.0
        %532 = vmatmul.mubr.f32.gmra.mxu0 %v291
        %v533 = vpop.f32.mrf.mxu0
        %v534 = vadd.f32 0.0, %v533
        %v535 = vpop.f32.mrf.mxu0
        %v536 = vadd.f32 0.0, %v535
        %537 = vmatprep.mubr.f32.mxu0 0.0
        %538 = vmatmul.mubr.f32.gmra.mxu0 %v292
        %v539 = vpop.f32.mrf.mxu0
        %v540 = vadd.f32 0.0, %v539
        %v541 = vpop.f32.mrf.mxu0
        %v542 = vadd.f32 0.0, %v541
        %543 = vmatprep.mubr.f32.mxu0 0.0
        %544 = vmatmul.mubr.f32.gmra.mxu0 %v293
        %v545 = vpop.f32.mrf.mxu0
        %v546 = vadd.f32 0.0, %v545
        %v547 = vpop.f32.mrf.mxu0
        %v548 = vadd.f32 0.0, %v547
        %549 = vmatprep.mubr.f32.mxu0 0.0
        %550 = vmatmul.mubr.f32.gmra.mxu0 %v294
        %v551 = vpop.f32.mrf.mxu0
        %v552 = vadd.f32 0.0, %v551
        %v553 = vpop.f32.mrf.mxu0
        %v554 = vadd.f32 0.0, %v553
        %555 = vmatprep.mubr.f32.mxu0 0.0
        %556 = vmatmul.mubr.f32.gmra.mxu0 %v295
        %v557 = vpop.f32.mrf.mxu0
        %v558 = vadd.f32 0.0, %v557
        %v559 = vpop.f32.mrf.mxu0
        %v560 = vadd.f32 0.0, %v559
        %561 = vdwg.mxu0
        %v562 = vxor.u32 %v427, 2147483648
        %v563 = vxor.u32 %v429, 2147483648
        %v564 = vxor.u32 %v433, 2147483648
        %v565 = vxor.u32 %v435, 2147483648
        %v566 = vxor.u32 %v439, 2147483648
        %v567 = vxor.u32 %v441, 2147483648
        %v568 = vxor.u32 %v445, 2147483648
        %v569 = vxor.u32 %v447, 2147483648
        %v570 = vxor.u32 %v451, 2147483648
        %v571 = vxor.u32 %v453, 2147483648
        %v572 = vxor.u32 %v457, 2147483648
        %v573 = vxor.u32 %v459, 2147483648
        %v574 = vmul.f32 %v562, 1.442695
        %v575 = vpow.pop %v574
        %v576 = vmul.f32 %v563, 1.442695
        %v577 = vpow.pop %v576
        %v578 = vmul.f32 %v564, 1.442695
        %v579 = vpow.pop %v578
        %v580 = vmul.f32 %v565, 1.442695
        %v581 = vpow.pop %v580
        %v582 = vmul.f32 %v566, 1.442695
        %v583 = vpow.pop %v582
        %v584 = vmul.f32 %v567, 1.442695
        %v585 = vpow.pop %v584
        %v586 = vmul.f32 %v568, 1.442695
        %v587 = vpow.pop %v586
        %v588 = vmul.f32 %v569, 1.442695
        %v589 = vpow.pop %v588
        %v590 = vmul.f32 %v570, 1.442695
        %v591 = vpow.pop %v590
        %v592 = vmul.f32 %v571, 1.442695
        %v593 = vpow.pop %v592
        %v594 = vmul.f32 %v572, 1.442695
        %v595 = vpow.pop %v594
        %v596 = vmul.f32 %v573, 1.442695
        %v597 = vpow.pop %v596
        %v598 = vadd.f32 %v575, 1.0
        %v599 = vadd.f32 %v577, 1.0
        %v600 = vadd.f32 %v579, 1.0
        %v601 = vadd.f32 %v581, 1.0
        %v602 = vadd.f32 %v583, 1.0
        %v603 = vadd.f32 %v585, 1.0
        %v604 = vadd.f32 %v587, 1.0
        %v605 = vadd.f32 %v589, 1.0
        %v606 = vadd.f32 %v591, 1.0
        %v607 = vadd.f32 %v593, 1.0
        %v608 = vadd.f32 %v595, 1.0
        %v609 = vadd.f32 %v597, 1.0
        %v610 = vrcp.pop %v598
        %v611 = vmul.f32 1.0, %v610
        %v612 = vrcp.pop %v599
        %v613 = vmul.f32 1.0, %v612
        %v614 = vrcp.pop %v600
        %v615 = vmul.f32 1.0, %v614
        %v616 = vrcp.pop %v601
        %v617 = vmul.f32 1.0, %v616
        %v618 = vrcp.pop %v602
        %v619 = vmul.f32 1.0, %v618
        %v620 = vrcp.pop %v603
        %v621 = vmul.f32 1.0, %v620
        %v622 = vrcp.pop %v604
        %v623 = vmul.f32 1.0, %v622
        %v624 = vrcp.pop %v605
        %v625 = vmul.f32 1.0, %v624
        %v626 = vrcp.pop %v606
        %v627 = vmul.f32 1.0, %v626
        %v628 = vrcp.pop %v607
        %v629 = vmul.f32 1.0, %v628
        %v630 = vrcp.pop %v608
        %v631 = vmul.f32 1.0, %v630
        %v632 = vrcp.pop %v609
        %v633 = vmul.f32 1.0, %v632
        %v634 = vmul.f32 %v427, %v611
        %v635 = vmul.f32 %v429, %v613
        %v636 = vmul.f32 %v433, %v615
        %v637 = vmul.f32 %v435, %v617
        %v638 = vmul.f32 %v439, %v619
        %v639 = vmul.f32 %v441, %v621
        %v640 = vmul.f32 %v445, %v623
        %v641 = vmul.f32 %v447, %v625
        %v642 = vmul.f32 %v451, %v627
        %v643 = vmul.f32 %v453, %v629
        %v644 = vmul.f32 %v457, %v631
        %v645 = vmul.f32 %v459, %v633
        %v646 = vmul.f32 %v634, %v528
        %v647 = vmul.f32 %v635, %v530
        %v648 = vmul.f32 %v636, %v534
        %v649 = vmul.f32 %v637, %v536
        %v650 = vmul.f32 %v638, %v540
        %v651 = vmul.f32 %v639, %v542
        %v652 = vmul.f32 %v640, %v546
        %v653 = vmul.f32 %v641, %v548
        %v654 = vmul.f32 %v642, %v552
        %v655 = vmul.f32 %v643, %v554
        %v656 = vmul.f32 %v644, %v558
        %v657 = vmul.f32 %v645, %v560
        %v658 = vld [vmem:[#allocation2] sm:$0xff]
        %v659 = vld [vmem:[#allocation2 + $0x8] sm:$0xff]
        %v660 = vld [vmem:[#allocation2 + $0x10] sm:$0xff]
        %v661 = vld [vmem:[#allocation2 + $0x18] sm:$0xff]
        %v662 = vld [vmem:[#allocation2 + $0x20] sm:$0xff]
        %v663 = vld [vmem:[#allocation2 + $0x28] sm:$0xff]
        %v664 = vld [vmem:[%s245] sm:$0xff]
        %v665 = vld [vmem:[%s245 + $0x8] sm:$0xff]
        %v666 = vld [vmem:[%s245 + $0x10] sm:$0xff]
        %v667 = vld [vmem:[%s245 + $0x18] sm:$0xff]
        %v668 = vld [vmem:[%s245 + $0x20] sm:$0xff]
        %v669 = vld [vmem:[%s245 + $0x28] sm:$0xff]
        %v670 = vld [vmem:[%s245 + $0x30] sm:$0xff]
        %v671 = vld [vmem:[%s245 + $0x38] sm:$0xff]
        %v672 = vld [vmem:[%s245 + $0x40] sm:$0xff]
        %v673 = vld [vmem:[%s245 + $0x48] sm:$0xff]
        %v674 = vld [vmem:[%s245 + $0x50] sm:$0xff]
        %v675 = vld [vmem:[%s245 + $0x58] sm:$0xff]
        %v676 = vld [vmem:[%s245 + $0x60] sm:$0xff]
        %v677 = vld [vmem:[%s245 + $0x68] sm:$0xff]
        %v678 = vld [vmem:[%s245 + $0x70] sm:$0xff]
        %v679 = vld [vmem:[%s245 + $0x78] sm:$0xff]
        %v680 = vld [vmem:[%s245 + $0x80] sm:$0xff]
        %v681 = vld [vmem:[%s245 + $0x88] sm:$0xff]
        %v682 = vld [vmem:[%s245 + $0x90] sm:$0xff]
        %v683 = vld [vmem:[%s245 + $0x98] sm:$0xff]
        %v684 = vld [vmem:[%s245 + $0xa0] sm:$0xff]
        %v685 = vld [vmem:[%s245 + $0xa8] sm:$0xff]
        %v686 = vld [vmem:[%s245 + $0xb0] sm:$0xff]
        %v687 = vld [vmem:[%s245 + $0xb8] sm:$0xff]
        %v688 = vld [vmem:[%s245 + $0xc0] sm:$0xff]
        %v689 = vld [vmem:[%s245 + $0xc8] sm:$0xff]
        %v690 = vld [vmem:[%s245 + $0xd0] sm:$0xff]
        %v691 = vld [vmem:[%s245 + $0xd8] sm:$0xff]
        %v692 = vld [vmem:[%s245 + $0xe0] sm:$0xff]
        %v693 = vld [vmem:[%s245 + $0xe8] sm:$0xff]
        %v694 = vld [vmem:[%s245 + $0xf0] sm:$0xff]
        %v695 = vld [vmem:[%s245 + $0xf8] sm:$0xff]
        %696 = vmatprep.subr.mxu0 0.0
        %697 = vmatpush1.msra.mxu0 %v679
        %698 = vmatprep.subr.mxu0 0.0
        %699 = vmatpush1.msra.mxu0 %v678
        %700 = vmatprep.subr.mxu0 0.0
        %701 = vmatpush1.msra.mxu0 %v677
        %702 = vmatprep.subr.mxu0 0.0
        %703 = vmatpush1.msra.mxu0 %v676
        %704 = vmatprep.subr.mxu0 0.0
        %705 = vmatpush1.msra.mxu0 %v675
        %706 = vmatprep.subr.mxu0 0.0
        %707 = vmatpush1.msra.mxu0 %v674
        %708 = vmatprep.subr.mxu0 0.0
        %709 = vmatpush1.msra.mxu0 %v673
        %710 = vmatprep.subr.mxu0 0.0
        %711 = vmatpush1.msra.mxu0 %v672
        %712 = vmatprep.subr.mxu0 0.0
        %713 = vmatpush1.msra.mxu0 %v671
        %714 = vmatprep.subr.mxu0 0.0
        %715 = vmatpush1.msra.mxu0 %v670
        %716 = vmatprep.subr.mxu0 0.0
        %717 = vmatpush1.msra.mxu0 %v669
        %718 = vmatprep.subr.mxu0 0.0
        %719 = vmatpush1.msra.mxu0 %v668
        %720 = vmatprep.subr.mxu0 0.0
        %721 = vmatpush1.msra.mxu0 %v667
        %722 = vmatprep.subr.mxu0 0.0
        %723 = vmatpush1.msra.mxu0 %v666
        %724 = vmatprep.subr.mxu0 0.0
        %725 = vmatpush1.msra.mxu0 %v665
        %726 = vmatprep.subr.mxu0 0.0
        %727 = vmatpush1.msra.mxu0 %v664
        %728 = vmatprep.subr.mxu0 0.0
        %729 = vmatpush2.msra.mxu0 %v695
        %730 = vmatprep.subr.mxu0 0.0
        %731 = vmatpush2.msra.mxu0 %v694
        %732 = vmatprep.subr.mxu0 0.0
        %733 = vmatpush2.msra.mxu0 %v693
        %734 = vmatprep.subr.mxu0 0.0
        %735 = vmatpush2.msra.mxu0 %v692
        %736 = vmatprep.subr.mxu0 0.0
        %737 = vmatpush2.msra.mxu0 %v691
        %738 = vmatprep.subr.mxu0 0.0
        %739 = vmatpush2.msra.mxu0 %v690
        %740 = vmatprep.subr.mxu0 0.0
        %741 = vmatpush2.msra.mxu0 %v689
        %742 = vmatprep.subr.mxu0 0.0
        %743 = vmatpush2.msra.mxu0 %v688
        %744 = vmatprep.subr.mxu0 0.0
        %745 = vmatpush2.msra.mxu0 %v687
        %746 = vmatprep.subr.mxu0 0.0
        %747 = vmatpush2.msra.mxu0 %v686
        %748 = vmatprep.subr.mxu0 0.0
        %749 = vmatpush2.msra.mxu0 %v685
        %750 = vmatprep.subr.mxu0 0.0
        %751 = vmatpush2.msra.mxu0 %v684
        %752 = vmatprep.subr.mxu0 0.0
        %753 = vmatpush2.msra.mxu0 %v683
        %754 = vmatprep.subr.mxu0 0.0
        %755 = vmatpush2.msra.mxu0 %v682
        %756 = vmatprep.subr.mxu0 0.0
        %757 = vmatpush2.msra.mxu0 %v681
        %758 = vmatprep.subr.mxu0 0.0
        %759 = vmatpush2.msra.mxu0 %v680
        %760 = vmatprep.mubr.f32.mxu0 %v647
        %761 = vmatmul.mubr.f32.gmra.mxu0 %v646
        %v762 = vpop.f32.mrf.mxu0
        %v763 = vadd.f32 0.0, %v762
        %v764 = vpop.f32.mrf.mxu0
        %765 = vmatprep.mubr.f32.mxu0 %v649
        %766 = vmatmul.mubr.f32.gmra.mxu0 %v648
        %v767 = vpop.f32.mrf.mxu0
        %v768 = vadd.f32 0.0, %v767
        %v769 = vpop.f32.mrf.mxu0
        %770 = vmatprep.mubr.f32.mxu0 %v651
        %771 = vmatmul.mubr.f32.gmra.mxu0 %v650
        %v772 = vpop.f32.mrf.mxu0
        %v773 = vadd.f32 0.0, %v772
        %v774 = vpop.f32.mrf.mxu0
        %775 = vmatprep.mubr.f32.mxu0 %v653
        %776 = vmatmul.mubr.f32.gmra.mxu0 %v652
        %v777 = vpop.f32.mrf.mxu0
        %v778 = vadd.f32 0.0, %v777
        %v779 = vpop.f32.mrf.mxu0
        %780 = vmatprep.mubr.f32.mxu0 %v655
        %781 = vmatmul.mubr.f32.gmra.mxu0 %v654
        %v782 = vpop.f32.mrf.mxu0
        %v783 = vadd.f32 0.0, %v782
        %v784 = vpop.f32.mrf.mxu0
        %785 = vmatprep.mubr.f32.mxu0 %v657
        %786 = vmatmul.mubr.f32.gmra.mxu0 %v656
        %v787 = vpop.f32.mrf.mxu0
        %v788 = vadd.f32 0.0, %v787
        %v789 = vpop.f32.mrf.mxu0
        %790 = vdwg.mxu0
        %v791 = vadd.f32 %v658, %v763
        %v792 = vadd.f32 %v659, %v768
        %v793 = vadd.f32 %v660, %v773
        %v794 = vadd.f32 %v661, %v778
        %v795 = vadd.f32 %v662, %v783
        %v796 = vadd.f32 %v663, %v788
        %797 = vst [vmem:[#allocation2] sm:$0xff] %v791
        %798 = vst [vmem:[#allocation2 + $0x8] sm:$0xff] %v792
        %799 = vst [vmem:[#allocation2 + $0x10] sm:$0xff] %v793
        %800 = vst [vmem:[#allocation2 + $0x18] sm:$0xff] %v794
        %801 = vst [vmem:[#allocation2 + $0x20] sm:$0xff] %v795
        %802 = vst [vmem:[#allocation2 + $0x28] sm:$0xff] %v796
        %p803 = scmp.eq.s32.totalorder %s28, 1
        // Predicated region
        $region49: #{tpu_custom_call.1} parent=31 // pred_check
          %p804 = pneg %p803
        $region50: #{tpu_custom_call.1} parent=31 // pred_check_branch
          %806 = sbr.rel (%p804) target = $region52
        $region51: #{tpu_custom_call.1} parent=31 // pred_region
          %v807 = vld [vmem:[#allocation2] sm:$0xff]
          %v808 = vld [vmem:[#allocation2 + $0x8] sm:$0xff]
          %v809 = vld [vmem:[#allocation2 + $0x10] sm:$0xff]
          %v810 = vld [vmem:[#allocation2 + $0x18] sm:$0xff]
          %v811 = vld [vmem:[#allocation2 + $0x20] sm:$0xff]
          %v812 = vld [vmem:[#allocation2 + $0x28] sm:$0xff]
          %813 = vst [vmem:[%s277] sm:$0xff] %v807
          %814 = vst [vmem:[%s277 + $0x8] sm:$0xff] %v808
          %815 = vst [vmem:[%s277 + $0x10] sm:$0xff] %v809
          %816 = vst [vmem:[%s277 + $0x18] sm:$0xff] %v810
          %817 = vst [vmem:[%s277 + $0x20] sm:$0xff] %v811
          %818 = vst [vmem:[%s277 + $0x28] sm:$0xff] %v812
        $region52: #{tpu_custom_call.1} parent=31 // pred_fallthru
          _
        %s819 = sand.u32 %s121, 1
        %s820 = scalar_lea.sflag [#allocation5], %s819
        %s821 = sand.u32 %s121, 1
        %s822 = smul.addr %s821, 48
        %s823 = scalar_lea.vmem [#allocation9], %s822
        // Predicated region
        $region53: #{tpu_custom_call.1} parent=31 // pred_check
          %p824 = pneg %p131
        $region54: #{tpu_custom_call.1} parent=31 // pred_check_branch
          %826 = sbr.rel (%p824) target = $region56
        $region55: #{tpu_custom_call.1} parent=31 // pred_region
          %s827 = smul.u32 6, %s27
          %s829 = ssub.s32 768, 768
          %830 = vsyncadd %s820, %s829
          %s831 = smul.addr %s827, 128
          %s832 = scalar_lea.hbm %s3, %s831
          %s833 = sshll.u32 %s823, 4
          %s834 = int_to_ptr.vmem [resolvable:$true] %s833
          %839 = dma.vmem_to_hbm [thread:$0]  %s834, 768, %s832, %s820, 128, 128, 8
        $region56: #{tpu_custom_call.1} parent=31 // pred_fallthru
          _
      $region32: #{tpu_custom_call.1} parent=5 // pred_fallthru
        _
      %p840 = scmp.le.s32.totalorder 2, %s18
      // Predicated region
      $region57: #{tpu_custom_call.1} parent=5 // pred_check
        %p841 = pneg %p840
      $region58: #{tpu_custom_call.1} parent=5 // pred_check_branch
        %843 = sbr.rel (%p841) target = $region60
      $region59: #{tpu_custom_call.1} parent=5 // pred_region
        %s844 = ssub.s32 %s18, 2
        // Predicated region
        $region61: #{tpu_custom_call.1} parent=59 // pred_check
          %p845 = pneg %p137
        $region62: #{tpu_custom_call.1} parent=59 // pred_check_branch
          %847 = sbr.rel (%p845) target = $region64
        $region63: #{tpu_custom_call.1} parent=59 // pred_region
          %s848 = sand.u32 %s122, 1
          %s849 = scalar_lea.sflag [#allocation5], %s848
          %s850 = sand.u32 %s122, 1
          %s851 = smul.addr %s850, 48
          %s852 = scalar_lea.vmem [#allocation9], %s851
          %853 = dma.done %s849, 768
        $region64: #{tpu_custom_call.1} parent=59 // pred_fallthru
          _
      $region60: #{tpu_custom_call.1} parent=5 // pred_fallthru
        _
    $region6: #{tpu_custom_call.1} parent=1 // loop_footer
      %s22 = sadd.s32 1, %s18
    $region7: #{tpu_custom_call.1} parent=1 // loop_footer_branch
      %17 = sbr.rel target = $region3
    $region8: #{tpu_custom_call.1} parent=1 // loop_exit
      _
    %854 = vsyncpa [#allocation4], 1
    %s855 = scalar_lea.sflag [#allocation4], 1
    %856 = vsyncpa %s855, 1
    %857 = vsyncpa [#allocation7], 1
    %s858 = scalar_lea.sflag [#allocation7], 1
    %859 = vsyncpa %s858, 1
    %860 = vsyncpa [#allocation5], 1
    %s861 = scalar_lea.sflag [#allocation5], 1
    %862 = vsyncpa %s861, 1

</llo_original>
